<compile_context>
chip_gen: v5e
topology: v5e:2x2
jax: 0.10.0
libtpu: 0.0.40
codegen_flags: <defaults>
</compile_context>

<pallas_src>
import math
import jax
import jax.numpy as jnp
from jax.experimental import pallas as pl
from jax.experimental.pallas import tpu as pltpu

NUM_LABELS = 3
E = 32            # txt_feat_size == img_feat_size == fixed_feat_size
PROJ = 16         # CLIP-style projection dim
SEQ = 8           # text sequence length
IMG = 16          # image spatial size
CH = 3            # image channels
PATCH = 4         # patch size for the synthetic vision encoder
VOCAB = 100
VOCAB_PAD = 128   # token table padded to a full lane group
PIX = CH * IMG * IMG   # 768 flattened pixels per example

# ---- packed weight-slab row bands (width 128, all f32) ---------------------
R_TTXT = 0                       # (2*VOCAB_PAD, 2E): block-diag tok_emb@W_txt
R_WT = 2 * VOCAB_PAD             # 256: (2E, 128) xt_wide -> fusion/tim/tpool
R_WV = R_WT + 2 * E              # 320: (E, 128)  xv0     -> fusion/tim/vpool
R_PROJ = R_WV + E                # 352: (2E, 2*PROJ) block-diag CLIP proj
R_HEAD = R_PROJ + 2 * E          # 416: (2E, 8) cls/iadds (from fused), tim
R_BBIG = R_HEAD + 2 * E          # 480: fusion bias row (lanes 0:2E)
R_BHEAD = R_BBIG + 8             # 488: head bias row (lanes 0:8)
R_CLSTOK = R_BHEAD + 8           # 496: vision cls-token bias row (lanes 0:E)
R_SCALE = R_CLSTOK + 8           # 504: logit_scale at lane 0
W_ROWS = R_SCALE + 8             # 512 rows -> 256 KB slab


def _vmem():
    return pl.BlockSpec(memory_space=pltpu.MemorySpace.VMEM)


# ---------------------------------------------------------------------------
# The single fused kernel.
#   ids/mask/tim_ids/tim_mask : (N, SEQ) int32
#   pix                       : (N, 768) f32   (flattened NCHW pixels)
#   w_ref                     : (512, 128) f32 packed weight slab
#   wvis_ref                  : (768, 32) f32  mean-patch -> E projection
#   outputs: out_cls (N,3), logits_per_text (N,N), out_tim (N,2),
#            out_iadds (N,2), mm_features (N,32)
# ---------------------------------------------------------------------------
def mm_fused_kernel(ids_ref, mask_ref, tids_ref, tmask_ref, pix_ref,
                    w_ref, wvis_ref,
                    cls_ref, logits_ref, tim_ref, iadds_ref, feat_ref):
    n = ids_ref.shape[0]
    f32 = jnp.float32

    # --- static row-band slices of the packed weight slab ------------------
    t_txt2 = w_ref[R_TTXT:R_TTXT + 2 * VOCAB_PAD, 0:2 * E]    # (256, 64)
    wt_big = w_ref[R_WT:R_WT + 2 * E, :]                       # (64, 128)
    wv_big = w_ref[R_WV:R_WV + E, :]                           # (32, 128)
    projw = w_ref[R_PROJ:R_PROJ + 2 * E, 0:2 * PROJ]           # (64, 32)
    w_head = w_ref[R_HEAD:R_HEAD + 2 * E, 0:8]                 # (64, 8)
    b_big = w_ref[R_BBIG:R_BBIG + 1, :]                        # (1, 128)
    b_head = w_ref[R_BHEAD:R_BHEAD + 1, 0:8]                   # (1, 8)
    cls_tok = w_ref[R_CLSTOK:R_CLSTOK + 1, 0:E]                # (1, 32)
    scale = w_ref[R_SCALE:R_SCALE + 1, 0:1]                    # (1, 1)

    # --- text encoder (main + TIM in one push): gather == one-hot matmul ---
    ids_cls = ids_ref[:, 0:1]                                  # CLS token id
    tids_cls = tids_ref[:, 0:1]
    lane = jax.lax.broadcasted_iota(jnp.int32, (n, 2 * VOCAB_PAD), 1)
    onehot = jnp.logical_or(lane == ids_cls,
                            lane == tids_cls + VOCAB_PAD).astype(f32)
    txt_pre = jnp.dot(onehot, t_txt2, preferred_element_type=f32)   # (n, 64)
    mask_f = mask_ref[:, 0:1].astype(f32)
    tmask_f = tmask_ref[:, 0:1].astype(f32)
    lane64 = jax.lax.broadcasted_iota(jnp.int32, (n, 2 * E), 1)
    # lanes [0:E) = xt0 (main), lanes [E:2E) = xt0_tim
    xt_wide = jnp.tanh(txt_pre * jnp.where(lane64 < E, mask_f, tmask_f))

    # --- vision encoder: mean-patch linear projection + cls-token bias -----
    xv0 = jnp.tanh(jnp.dot(pix_ref[...], wvis_ref[...],
                           preferred_element_type=f32) + cls_tok)    # (n, E)

    # --- 'concat' fusion (main + TIM) and both poolers: two accumulating
    #     MXU pushes into one 128-lane result --------------------------------
    pre = (jnp.dot(xt_wide, wt_big, preferred_element_type=f32)
           + jnp.dot(xv0, wv_big, preferred_element_type=f32)
           + b_big)                                                  # (n, 128)
    fused_wide = jnp.maximum(pre[:, 0:2 * E], 0.0)    # [fused | fused_tim]
    pools = jnp.tanh(pre[:, 2 * E:4 * E])             # [xt_pool | xv_pool]

    # --- CLIP projections (block-diag), normalize, logits_per_text ---------
    embs = jnp.dot(pools, projw, preferred_element_type=f32)         # (n, 32)
    t_emb = embs[:, 0:PROJ]
    v_emb = embs[:, PROJ:2 * PROJ]
    t_n = t_emb * jax.lax.rsqrt(
        jnp.maximum(jnp.sum(t_emb * t_emb, axis=-1, keepdims=True), 1e-24))
    v_n = v_emb * jax.lax.rsqrt(
        jnp.maximum(jnp.sum(v_emb * v_emb, axis=-1, keepdims=True), 1e-24))
    logits_ref[...] = scale * jax.lax.dot_general(
        t_n, v_n, (((1,), (1,)), ((), ())), preferred_element_type=f32)

    # --- classification / iadds / TIM heads (one push) ---------------------
    head = jnp.dot(fused_wide, w_head, preferred_element_type=f32) + b_head
    cls_ref[...] = head[:, 0:NUM_LABELS]
    iadds_ref[...] = head[:, NUM_LABELS:NUM_LABELS + 2]
    tim_ref[...] = head[:, NUM_LABELS + 2:NUM_LABELS + 4]
    feat_ref[...] = fused_wide[:, 0:E]     # direct copy -> bit-exact features


# ---------------------------------------------------------------------------
# Forward wrapper: one pallas_call, zero surrounding compute (reshape is a
# free bitcast of contiguous NCHW pixels).
# ---------------------------------------------------------------------------
def mm_model_forward(ids, mask, pixel_values, tim_inputs, params):
    tim_ids, tim_mask = tim_inputs
    n = ids.shape[0]
    pix = pixel_values.reshape(n, PIX)
    w_slab, w_vis = params["W_slab"], params["W_vis"]

    flops = 2 * n * (2 * VOCAB_PAD * 2 * E + PIX * E + 2 * E * 128 + E * 128
                     + 2 * E * 2 * PROJ + 2 * E * 8 + PROJ * n)
    bytes_accessed = 4 * (w_slab.size + w_vis.size + n * PIX + 4 * n * SEQ
                          + n * (NUM_LABELS + n + 2 + 2 + E))

    out_cls, logits, out_tim, out_iadds, mm_feat = pl.pallas_call(
        mm_fused_kernel,
        out_shape=(
            jax.ShapeDtypeStruct((n, NUM_LABELS), jnp.float32),
            jax.ShapeDtypeStruct((n, n), jnp.float32),
            jax.ShapeDtypeStruct((n, 2), jnp.float32),
            jax.ShapeDtypeStruct((n, 2), jnp.float32),
            jax.ShapeDtypeStruct((n, E), jnp.float32),
        ),
        in_specs=[_vmem()] * 7,
        out_specs=(_vmem(),) * 5,
        cost_estimate=pl.CostEstimate(flops=flops, transcendentals=162 * n,
                                      bytes_accessed=bytes_accessed),
    )(ids, mask, tim_ids, tim_mask, pix, w_slab, w_vis)
    return out_cls, logits, out_tim, out_iadds, mm_feat


# ---------------------------------------------------------------------------
# One-time host-side packing of every weight/bias/constant into the slab.
# nn.Linear weights are stored transposed (in_features, out_features).
# ---------------------------------------------------------------------------
def pack_weight_slab(p):
    W = jnp.zeros((W_ROWS, 128), jnp.float32)
    wf_t = p["W_fusion"][0:E, :]            # linear_fusion rows for x_t[:,0,:]
    wf_v = p["W_fusion"][E:2 * E, :]        # linear_fusion rows for x_v[:,0,:]
    t_txt = p["tok_emb"] @ p["W_txt"]       # precomposed (gather then W_txt)

    # text band: block-diag so one push yields [xt0_pre | xt0_tim_pre]
    W = W.at[R_TTXT:R_TTXT + VOCAB, 0:E].set(t_txt)
    W = W.at[R_TTXT + VOCAB_PAD:R_TTXT + VOCAB_PAD + VOCAB, E:2 * E].set(t_txt)
    # xt_wide contributions: fusion (main), fusion (TIM), xt_pool pre-act
    W = W.at[R_WT:R_WT + E, 0:E].set(wf_t)
    W = W.at[R_WT + E:R_WT + 2 * E, E:2 * E].set(wf_t)
    W = W.at[R_WT:R_WT + E, 2 * E:3 * E].set(p["W_tpool"])
    # xv0 contributions: fusion (shared by both passes), xv_pool pre-act
    W = W.at[R_WV:R_WV + E, 0:E].set(wf_v)
    W = W.at[R_WV:R_WV + E, E:2 * E].set(wf_v)
    W = W.at[R_WV:R_WV + E, 3 * E:4 * E].set(p["W_vpool"])
    # block-diag CLIP projections
    W = W.at[R_PROJ:R_PROJ + E, 0:PROJ].set(p["W_tproj"])
    W = W.at[R_PROJ + E:R_PROJ + 2 * E, PROJ:2 * PROJ].set(p["W_vproj"])
    # heads: cls / iadds from fused, tim from fused_tim
    W = W.at[R_HEAD:R_HEAD + E, 0:NUM_LABELS].set(p["W_cls"])
    W = W.at[R_HEAD:R_HEAD + E, NUM_LABELS:NUM_LABELS + 2].set(p["W_iadds"])
    W = W.at[R_HEAD + E:R_HEAD + 2 * E,
             NUM_LABELS + 2:NUM_LABELS + 4].set(p["W_tim"])
    # biases / constants
    W = W.at[R_BBIG, 0:E].set(p["b_fusion"][0])
    W = W.at[R_BBIG, E:2 * E].set(p["b_fusion"][0])
    W = W.at[R_BHEAD, 0:NUM_LABELS].set(p["b_cls"][0])
    W = W.at[R_BHEAD, NUM_LABELS:NUM_LABELS + 2].set(p["b_iadds"][0])
    W = W.at[R_BHEAD, NUM_LABELS + 2:NUM_LABELS + 4].set(p["b_tim"][0])
    W = W.at[R_CLSTOK, 0:E].set(p["cls_tok"][0])
    W = W.at[R_SCALE, 0].set(p["logit_scale"])
    return W


def make_w_vis(p):
    # Compose (patch extraction + mean over patches) with W_patch into one
    # (768, E) matrix so the vision stand-in is a single in-kernel matmul.
    c = jnp.arange(CH)[:, None, None]
    y = jnp.arange(IMG)[None, :, None]
    x = jnp.arange(IMG)[None, None, :]
    feat = (c * PATCH * PATCH + (y % PATCH) * PATCH + (x % PATCH)).reshape(-1)
    n_patch = (IMG // PATCH) ** 2
    pool = jax.nn.one_hot(feat, CH * PATCH * PATCH, dtype=jnp.float32) / n_patch
    return pool @ p["W_patch"]                                   # (768, E)


def init_params(key):
    ks = jax.random.split(key, 16)
    s = 0.02
    params = {
        # synthetic dual-encoder stand-in
        "tok_emb": s * jax.random.normal(ks[0], (VOCAB, E), jnp.float32),
        "W_txt": s * jax.random.normal(ks[1], (E, E), jnp.float32),
        "W_tpool": s * jax.random.normal(ks[2], (E, E), jnp.float32),
        "W_patch": s * jax.random.normal(ks[3], (CH * PATCH * PATCH, E), jnp.float32),
        "cls_tok": s * jax.random.normal(ks[4], (1, E), jnp.float32),
        "W_vpool": s * jax.random.normal(ks[5], (E, E), jnp.float32),
        "W_tproj": s * jax.random.normal(ks[6], (E, PROJ), jnp.float32),
        "W_vproj": s * jax.random.normal(ks[7], (E, PROJ), jnp.float32),
        "logit_scale": jnp.float32(math.exp(math.log(1.0 / 0.07))),
        # MM_Model head parameters
        "W_fusion": s * jax.random.normal(ks[8], (2 * E, E), jnp.float32),
        "b_fusion": jnp.zeros((1, E), jnp.float32),
        "W_cls": s * jax.random.normal(ks[9], (E, NUM_LABELS), jnp.float32),
        "b_cls": jnp.zeros((1, NUM_LABELS), jnp.float32),
        "W_tim": s * jax.random.normal(ks[10], (E, 2), jnp.float32),
        "b_tim": jnp.zeros((1, 2), jnp.float32),
        "W_iadds": s * jax.random.normal(ks[11], (E, 2), jnp.float32),
        "b_iadds": jnp.zeros((1, 2), jnp.float32),
    }
    # one-time packing for the fused kernel (2 weight operands total)
    params["W_slab"] = pack_weight_slab(params)
    params["W_vis"] = make_w_vis(params)
    return params


if __name__ == "__main__":
    key = jax.random.PRNGKey(0)
    k_param, k_ids, k_pix, k_tim = jax.random.split(key, 4)

    params = init_params(k_param)

    N = 2
    ids = jax.random.randint(k_ids, (N, SEQ), 0, VOCAB, dtype=jnp.int32)
    mask = jnp.ones((N, SEQ), jnp.int32)
    pixel_values = jax.random.normal(k_pix, (N, CH, IMG, IMG), jnp.float32)
    tim_ids = jax.random.randint(k_tim, (N, SEQ), 0, VOCAB, dtype=jnp.int32)
    tim_mask = jnp.ones((N, SEQ), jnp.int32)

    fwd = jax.jit(mm_model_forward)
    outs = fwd(ids, mask, pixel_values, (tim_ids, tim_mask), params)
    jax.block_until_ready(outs)
    out_cls, logits_per_text, out_tim, out_iadds, mm_features = outs

    assert out_cls.shape == (N, NUM_LABELS)
    assert logits_per_text.shape == (N, N)
    assert out_tim.shape == (N, 2)
    assert out_iadds.shape == (N, 2)
    assert mm_features.shape == (N, E)
    print("KERNEL_OK")
</pallas_src>

<mosaic_0001>
module attributes {stable_mosaic.version = 11 : i64} {
  func.func @mm_fused_kernel(%arg0: memref<2x8xi32, #tpu.memory_space<vmem>>, %arg1: memref<2x8xi32, #tpu.memory_space<vmem>>, %arg2: memref<2x8xi32, #tpu.memory_space<vmem>>, %arg3: memref<2x8xi32, #tpu.memory_space<vmem>>, %arg4: memref<2x768xf32, #tpu.memory_space<vmem>>, %arg5: memref<512x128xf32, #tpu.memory_space<vmem>>, %arg6: memref<768x32xf32, #tpu.memory_space<vmem>>, %arg7: memref<2x3xf32, #tpu.memory_space<vmem>>, %arg8: memref<2x2xf32, #tpu.memory_space<vmem>>, %arg9: memref<2x2xf32, #tpu.memory_space<vmem>>, %arg10: memref<2x2xf32, #tpu.memory_space<vmem>>, %arg11: memref<2x32xf32, #tpu.memory_space<vmem>>) attributes {dimension_semantics = [], scalar_prefetch = 0 : i64, scratch_operands = 0 : i64, tpu.core_type = #tpu.core_type<tc>} {
    %c0 = arith.constant 0 : index
    %c0_0 = arith.constant 0 : index
    %0 = vector.load %arg5[%c0, %c0_0] : memref<512x128xf32, #tpu.memory_space<vmem>>, vector<256x64xf32>
    %c256 = arith.constant 256 : index
    %c0_1 = arith.constant 0 : index
    %1 = vector.load %arg5[%c256, %c0_1] : memref<512x128xf32, #tpu.memory_space<vmem>>, vector<64x128xf32>
    %c320 = arith.constant 320 : index
    %c0_2 = arith.constant 0 : index
    %2 = vector.load %arg5[%c320, %c0_2] : memref<512x128xf32, #tpu.memory_space<vmem>>, vector<32x128xf32>
    %c352 = arith.constant 352 : index
    %c0_3 = arith.constant 0 : index
    %3 = vector.load %arg5[%c352, %c0_3] : memref<512x128xf32, #tpu.memory_space<vmem>>, vector<64x32xf32>
    %c416 = arith.constant 416 : index
    %c0_4 = arith.constant 0 : index
    %4 = vector.load %arg5[%c416, %c0_4] : memref<512x128xf32, #tpu.memory_space<vmem>>, vector<64x8xf32>
    %c480 = arith.constant 480 : index
    %c0_5 = arith.constant 0 : index
    %5 = vector.load %arg5[%c480, %c0_5] : memref<512x128xf32, #tpu.memory_space<vmem>>, vector<1x128xf32>
    %c488 = arith.constant 488 : index
    %c0_6 = arith.constant 0 : index
    %6 = vector.load %arg5[%c488, %c0_6] : memref<512x128xf32, #tpu.memory_space<vmem>>, vector<1x8xf32>
    %c496 = arith.constant 496 : index
    %c0_7 = arith.constant 0 : index
    %7 = vector.load %arg5[%c496, %c0_7] : memref<512x128xf32, #tpu.memory_space<vmem>>, vector<1x32xf32>
    %c504 = arith.constant 504 : index
    %c0_8 = arith.constant 0 : index
    %8 = vector.load %arg5[%c504, %c0_8] : memref<512x128xf32, #tpu.memory_space<vmem>>, vector<1x1xf32>
    %c0_9 = arith.constant 0 : index
    %c0_10 = arith.constant 0 : index
    %9 = vector.load %arg0[%c0_9, %c0_10] : memref<2x8xi32, #tpu.memory_space<vmem>>, vector<2x1xi32>
    %c0_11 = arith.constant 0 : index
    %c0_12 = arith.constant 0 : index
    %10 = vector.load %arg2[%c0_11, %c0_12] : memref<2x8xi32, #tpu.memory_space<vmem>>, vector<2x1xi32>
    %11 = tpu.iota {dimensions = array<i32: 1>} : vector<2x256xi32>
    %12 = vector.broadcast %9 : vector<2x1xi32> to vector<2x256xi32>
    %13 = arith.cmpi eq, %11, %12 : vector<2x256xi32>
    %c128_i32 = arith.constant 128 : i32
    %14 = vector.broadcast %c128_i32 : i32 to vector<2x1xi32>
    %15 = arith.addi %10, %14 : vector<2x1xi32>
    %16 = vector.broadcast %15 : vector<2x1xi32> to vector<2x256xi32>
    %17 = arith.cmpi eq, %11, %16 : vector<2x256xi32>
    %18 = arith.ori %13, %17 : vector<2x256xi1>
    %19 = arith.extui %18 : vector<2x256xi1> to vector<2x256xi32>
    %20 = arith.sitofp %19 : vector<2x256xi32> to vector<2x256xf32>
    %cst = arith.constant dense<0.000000e+00> : vector<2x64xf32>
    %21 = tpu.matmul %20, %0, %cst {dimension_numbers = #tpu.dot_dimension_numbers<[1], [0], [0], [1], [0, 0, 1, 1], [], []>} : vector<2x256xf32>, vector<256x64xf32>, vector<2x64xf32> -> vector<2x64xf32>
    %c0_13 = arith.constant 0 : index
    %c0_14 = arith.constant 0 : index
    %22 = vector.load %arg1[%c0_13, %c0_14] : memref<2x8xi32, #tpu.memory_space<vmem>>, vector<2x1xi32>
    %23 = arith.sitofp %22 : vector<2x1xi32> to vector<2x1xf32>
    %c0_15 = arith.constant 0 : index
    %c0_16 = arith.constant 0 : index
    %24 = vector.load %arg3[%c0_15, %c0_16] : memref<2x8xi32, #tpu.memory_space<vmem>>, vector<2x1xi32>
    %25 = arith.sitofp %24 : vector<2x1xi32> to vector<2x1xf32>
    %26 = tpu.iota {dimensions = array<i32: 1>} : vector<2x64xi32>
    %c32_i32 = arith.constant 32 : i32
    %27 = vector.broadcast %c32_i32 : i32 to vector<2x64xi32>
    %28 = arith.cmpi slt, %26, %27 : vector<2x64xi32>
    %29 = vector.shape_cast %23 : vector<2x1xf32> to vector<2x1xf32>
    %30 = vector.broadcast %29 : vector<2x1xf32> to vector<2x64xf32>
    %31 = vector.shape_cast %25 : vector<2x1xf32> to vector<2x1xf32>
    %32 = vector.broadcast %31 : vector<2x1xf32> to vector<2x64xf32>
    %33 = arith.select %28, %30, %32 : vector<2x64xi1>, vector<2x64xf32>
    %34 = arith.mulf %21, %33 : vector<2x64xf32>
    %35 = math.tanh %34 : vector<2x64xf32>
    %c0_17 = arith.constant 0 : index
    %c0_18 = arith.constant 0 : index
    %36 = vector.load %arg4[%c0_17, %c0_18] : memref<2x768xf32, #tpu.memory_space<vmem>>, vector<2x768xf32>
    %c0_19 = arith.constant 0 : index
    %c0_20 = arith.constant 0 : index
    %37 = vector.load %arg6[%c0_19, %c0_20] : memref<768x32xf32, #tpu.memory_space<vmem>>, vector<768x32xf32>
    %cst_21 = arith.constant dense<0.000000e+00> : vector<2x32xf32>
    %38 = tpu.matmul %36, %37, %cst_21 {dimension_numbers = #tpu.dot_dimension_numbers<[1], [0], [0], [1], [0, 0, 1, 1], [], []>} : vector<2x768xf32>, vector<768x32xf32>, vector<2x32xf32> -> vector<2x32xf32>
    %39 = vector.broadcast %7 : vector<1x32xf32> to vector<2x32xf32>
    %40 = arith.addf %38, %39 : vector<2x32xf32>
    %41 = math.tanh %40 : vector<2x32xf32>
    %cst_22 = arith.constant dense<0.000000e+00> : vector<2x128xf32>
    %42 = tpu.matmul %35, %1, %cst_22 {dimension_numbers = #tpu.dot_dimension_numbers<[1], [0], [0], [1], [0, 0, 1, 1], [], []>} : vector<2x64xf32>, vector<64x128xf32>, vector<2x128xf32> -> vector<2x128xf32>
    %cst_23 = arith.constant dense<0.000000e+00> : vector<2x128xf32>
    %43 = tpu.matmul %41, %2, %cst_23 {dimension_numbers = #tpu.dot_dimension_numbers<[1], [0], [0], [1], [0, 0, 1, 1], [], []>} : vector<2x32xf32>, vector<32x128xf32>, vector<2x128xf32> -> vector<2x128xf32>
    %44 = arith.addf %42, %43 : vector<2x128xf32>
    %45 = vector.broadcast %5 : vector<1x128xf32> to vector<2x128xf32>
    %46 = arith.addf %44, %45 : vector<2x128xf32>
    %47 = vector.extract_strided_slice %46 {offsets = [0, 0], sizes = [2, 64], strides = [1, 1]} : vector<2x128xf32> to vector<2x64xf32>
    %cst_24 = arith.constant 0.000000e+00 : f32
    %48 = vector.broadcast %cst_24 : f32 to vector<2x64xf32>
    %49 = arith.maximumf %47, %48 : vector<2x64xf32>
    %50 = vector.extract_strided_slice %46 {offsets = [0, 64], sizes = [2, 64], strides = [1, 1]} : vector<2x128xf32> to vector<2x64xf32>
    %51 = math.tanh %50 : vector<2x64xf32>
    %cst_25 = arith.constant dense<0.000000e+00> : vector<2x32xf32>
    %52 = tpu.matmul %51, %3, %cst_25 {dimension_numbers = #tpu.dot_dimension_numbers<[1], [0], [0], [1], [0, 0, 1, 1], [], []>} : vector<2x64xf32>, vector<64x32xf32>, vector<2x32xf32> -> vector<2x32xf32>
    %53 = vector.extract_strided_slice %52 {offsets = [0, 0], sizes = [2, 16], strides = [1, 1]} : vector<2x32xf32> to vector<2x16xf32>
    %54 = vector.extract_strided_slice %52 {offsets = [0, 16], sizes = [2, 16], strides = [1, 1]} : vector<2x32xf32> to vector<2x16xf32>
    %55 = arith.mulf %53, %53 : vector<2x16xf32>
    %cst_26 = arith.constant dense<0.000000e+00> : vector<2xf32>
    %56 = vector.multi_reduction <add>, %55, %cst_26 [1] : vector<2x16xf32> to vector<2xf32>
    %57 = vector.shape_cast %56 : vector<2xf32> to vector<2x1xf32>
    %cst_27 = arith.constant 1.000000e-24 : f32
    %58 = vector.broadcast %cst_27 : f32 to vector<2x1xf32>
    %59 = arith.maximumf %57, %58 : vector<2x1xf32>
    %60 = math.rsqrt %59 : vector<2x1xf32>
    %61 = vector.broadcast %60 : vector<2x1xf32> to vector<2x16xf32>
    %62 = arith.mulf %53, %61 : vector<2x16xf32>
    %63 = arith.mulf %54, %54 : vector<2x16xf32>
    %cst_28 = arith.constant dense<0.000000e+00> : vector<2xf32>
    %64 = vector.multi_reduction <add>, %63, %cst_28 [1] : vector<2x16xf32> to vector<2xf32>
    %65 = vector.shape_cast %64 : vector<2xf32> to vector<2x1xf32>
    %cst_29 = arith.constant 1.000000e-24 : f32
    %66 = vector.broadcast %cst_29 : f32 to vector<2x1xf32>
    %67 = arith.maximumf %65, %66 : vector<2x1xf32>
    %68 = math.rsqrt %67 : vector<2x1xf32>
    %69 = vector.broadcast %68 : vector<2x1xf32> to vector<2x16xf32>
    %70 = arith.mulf %54, %69 : vector<2x16xf32>
    %cst_30 = arith.constant dense<0.000000e+00> : vector<2x2xf32>
    %71 = tpu.matmul %62, %70, %cst_30 {dimension_numbers = #tpu.dot_dimension_numbers<[1], [1], [0], [0], [0, 0, 1, 0], [], []>} : vector<2x16xf32>, vector<2x16xf32>, vector<2x2xf32> -> vector<2x2xf32>
    %72 = vector.broadcast %8 : vector<1x1xf32> to vector<2x2xf32>
    %73 = arith.mulf %72, %71 : vector<2x2xf32>
    %c0_31 = arith.constant 0 : index
    %c0_32 = arith.constant 0 : index
    %74 = vector.load %arg8[%c0_31, %c0_32] : memref<2x2xf32, #tpu.memory_space<vmem>>, vector<2x2xf32>
    tpu.vector_store %arg8[%c0_31, %c0_32], %73 {strides = array<i32>} : memref<2x2xf32, #tpu.memory_space<vmem>>, vector<2x2xf32>,
    %cst_33 = arith.constant dense<0.000000e+00> : vector<2x8xf32>
    %75 = tpu.matmul %49, %4, %cst_33 {dimension_numbers = #tpu.dot_dimension_numbers<[1], [0], [0], [1], [0, 0, 1, 1], [], []>} : vector<2x64xf32>, vector<64x8xf32>, vector<2x8xf32> -> vector<2x8xf32>
    %76 = vector.broadcast %6 : vector<1x8xf32> to vector<2x8xf32>
    %77 = arith.addf %75, %76 : vector<2x8xf32>
    %78 = vector.extract_strided_slice %77 {offsets = [0, 0], sizes = [2, 3], strides = [1, 1]} : vector<2x8xf32> to vector<2x3xf32>
    %c0_34 = arith.constant 0 : index
    %c0_35 = arith.constant 0 : index
    %79 = vector.load %arg7[%c0_34, %c0_35] : memref<2x3xf32, #tpu.memory_space<vmem>>, vector<2x3xf32>
    tpu.vector_store %arg7[%c0_34, %c0_35], %78 {strides = array<i32>} : memref<2x3xf32, #tpu.memory_space<vmem>>, vector<2x3xf32>,
    %80 = vector.extract_strided_slice %77 {offsets = [0, 3], sizes = [2, 2], strides = [1, 1]} : vector<2x8xf32> to vector<2x2xf32>
    %c0_36 = arith.constant 0 : index
    %c0_37 = arith.constant 0 : index
    %81 = vector.load %arg10[%c0_36, %c0_37] : memref<2x2xf32, #tpu.memory_space<vmem>>, vector<2x2xf32>
    tpu.vector_store %arg10[%c0_36, %c0_37], %80 {strides = array<i32>} : memref<2x2xf32, #tpu.memory_space<vmem>>, vector<2x2xf32>,
    %82 = vector.extract_strided_slice %77 {offsets = [0, 5], sizes = [2, 2], strides = [1, 1]} : vector<2x8xf32> to vector<2x2xf32>
    %c0_38 = arith.constant 0 : index
    %c0_39 = arith.constant 0 : index
    %83 = vector.load %arg9[%c0_38, %c0_39] : memref<2x2xf32, #tpu.memory_space<vmem>>, vector<2x2xf32>
    tpu.vector_store %arg9[%c0_38, %c0_39], %82 {strides = array<i32>} : memref<2x2xf32, #tpu.memory_space<vmem>>, vector<2x2xf32>,
    %84 = vector.extract_strided_slice %49 {offsets = [0, 0], sizes = [2, 32], strides = [1, 1]} : vector<2x64xf32> to vector<2x32xf32>
    %c0_40 = arith.constant 0 : index
    %c0_41 = arith.constant 0 : index
    %85 = vector.load %arg11[%c0_40, %c0_41] : memref<2x32xf32, #tpu.memory_space<vmem>>, vector<2x32xf32>
    tpu.vector_store %arg11[%c0_40, %c0_41], %84 {strides = array<i32>} : memref<2x32xf32, #tpu.memory_space<vmem>>, vector<2x32xf32>,
    return
  }
}

</mosaic_0001>

<llo_original>
// kernel: mm_model_forward.1
$region0: #{mm_model_forward.1}
  #allocation0 [shape = 'u32[]', space=smem, size = 0x4, offset = 0x4, fixed_abs, tag = 'smem constant byte address 0x4 - core index']
  #allocation1 [shape = 'u32[72,128]{1,0:T(1,128)}', space=vmem, size = 0x9000, scoped, tag = 'internal scratch']
  %s0 = inlined_call_operand.vmem [shape: s32[2,8], index: 0, kind: input, shape index: {}]
  %s1 = inlined_call_operand.vmem [shape: s32[2,8], index: 1, kind: input, shape index: {}]
  %s2 = inlined_call_operand.vmem [shape: s32[2,8], index: 2, kind: input, shape index: {}]
  %s3 = inlined_call_operand.vmem [shape: s32[2,8], index: 3, kind: input, shape index: {}]
  %s4 = inlined_call_operand.vmem [shape: f32[2,768], index: 4, kind: input, shape index: {}]
  %s5 = inlined_call_operand.vmem [shape: f32[512,128], index: 5, kind: input, shape index: {}]
  %s6 = inlined_call_operand.vmem [shape: f32[768,32], index: 6, kind: input, shape index: {}]
  %s7 = inlined_call_operand.hbm [shape: f32[2,3], index: 7, kind: output, shape index: {0}]
  %s8 = inlined_call_operand.hbm [shape: f32[2,2], index: 8, kind: output, shape index: {1}]
  %s9 = inlined_call_operand.hbm [shape: f32[2,2], index: 9, kind: output, shape index: {2}]
  %s10 = inlined_call_operand.hbm [shape: f32[2,2], index: 10, kind: output, shape index: {3}]
  %s11 = inlined_call_operand.hbm [shape: f32[2,32], index: 11, kind: output, shape index: {4}]
  %12 = xla_tuple %s7, %s8, %s9, %s10, %s11
  %s13 = sld [smem:[#allocation0]]
  $region70: #{mm_model_forward.1} parent=0
    _
  %s15 = ssub.s32 1, %s13
  %s16 = scalar_select 0, %s15, %s13
  $region1: #{mm_model_forward.1} parent=0
    #allocation2 [shape = 'u8[1024]{0}', space=vmem, size = 0x400, scoped, tag = 'output window, operand 0, single buffered']
    #allocation3 [shape = 's32[1]{0}', space=sflag, size = 0x4, scoped, tag = 'scoped memory for mm_model_forward.1']
    #allocation4 [shape = 'u8[1024]{0}', space=vmem, size = 0x400, scoped, tag = 'output window, operand 1, single buffered']
    #allocation5 [shape = 's32[1]{0}', space=sflag, size = 0x4, scoped, tag = 'scoped memory for mm_model_forward.1']
    #allocation6 [shape = 'u8[1024]{0}', space=vmem, size = 0x400, scoped, tag = 'output window, operand 2, single buffered']
    #allocation7 [shape = 'u8[1024]{0}', space=vmem, size = 0x400, scoped, tag = 'output window, operand 3, single buffered']
    #allocation8 [shape = 's32[1]{0}', space=sflag, size = 0x4, scoped, tag = 'scoped memory for mm_model_forward.1']
    #allocation9 [shape = 'u8[1024]{0}', space=vmem, size = 0x400, scoped, tag = 'output window, operand 4, single buffered']
    %17 = vsyncpa [#allocation3], 0
    %18 = vsyncpa [#allocation5], 0
    %19 = vsyncpa [#allocation8], 0
    // Predicated region
    $region2: #{mm_model_forward.1} parent=1 // pred_check
      _
    $region3: #{mm_model_forward.1} parent=1 // pred_check_branch
      %21 = sbr.rel (0) target = $region5
    $region4: #{mm_model_forward.1} parent=1 // pred_region
      _
    $region5: #{mm_model_forward.1} parent=1 // pred_fallthru
      _
    // Predicated region
    $region6: #{mm_model_forward.1} parent=1 // pred_check
      _
    $region7: #{mm_model_forward.1} parent=1 // pred_check_branch
      %23 = sbr.rel (0) target = $region9
    $region8: #{mm_model_forward.1} parent=1 // pred_region
      _
    $region9: #{mm_model_forward.1} parent=1 // pred_fallthru
      _
    // Predicated region
    $region10: #{mm_model_forward.1} parent=1 // pred_check
      _
    $region11: #{mm_model_forward.1} parent=1 // pred_check_branch
      %25 = sbr.rel (0) target = $region13
    $region12: #{mm_model_forward.1} parent=1 // pred_region
      _
    $region13: #{mm_model_forward.1} parent=1 // pred_fallthru
      _
    // Predicated region
    $region14: #{mm_model_forward.1} parent=1 // pred_check
      _
    $region15: #{mm_model_forward.1} parent=1 // pred_check_branch
      %27 = sbr.rel (0) target = $region17
    $region16: #{mm_model_forward.1} parent=1 // pred_region
      _
    $region17: #{mm_model_forward.1} parent=1 // pred_fallthru
      _
    // Predicated region
    $region18: #{mm_model_forward.1} parent=1 // pred_check
      _
    $region19: #{mm_model_forward.1} parent=1 // pred_check_branch
      %29 = sbr.rel (0) target = $region21
    $region20: #{mm_model_forward.1} parent=1 // pred_region
      _
    $region21: #{mm_model_forward.1} parent=1 // pred_fallthru
      _
    // Predicated region
    $region22: #{mm_model_forward.1} parent=1 // pred_check
      _
    $region23: #{mm_model_forward.1} parent=1 // pred_check_branch
      %31 = sbr.rel (0) target = $region25
    $region24: #{mm_model_forward.1} parent=1 // pred_region
      _
    $region25: #{mm_model_forward.1} parent=1 // pred_fallthru
      _
    // Predicated region
    $region26: #{mm_model_forward.1} parent=1 // pred_check
      _
    $region27: #{mm_model_forward.1} parent=1 // pred_check_branch
      %33 = sbr.rel (0) target = $region29
    $region28: #{mm_model_forward.1} parent=1 // pred_region
      _
    $region29: #{mm_model_forward.1} parent=1 // pred_fallthru
      _
    %v34 = vld [vmem:[%s5] sm:$0xff]
    %v35 = vld [vmem:[%s5 + $0x8] sm:$0xff]
    %v36 = vld [vmem:[%s5 + $0x10] sm:$0xff]
    %v37 = vld [vmem:[%s5 + $0x18] sm:$0xff]
    %v38 = vld [vmem:[%s5 + $0x20] sm:$0xff]
    %v39 = vld [vmem:[%s5 + $0x28] sm:$0xff]
    %v40 = vld [vmem:[%s5 + $0x30] sm:$0xff]
    %v41 = vld [vmem:[%s5 + $0x38] sm:$0xff]
    %v42 = vld [vmem:[%s5 + $0x40] sm:$0xff]
    %v43 = vld [vmem:[%s5 + $0x48] sm:$0xff]
    %v44 = vld [vmem:[%s5 + $0x50] sm:$0xff]
    %v45 = vld [vmem:[%s5 + $0x58] sm:$0xff]
    %v46 = vld [vmem:[%s5 + $0x60] sm:$0xff]
    %v47 = vld [vmem:[%s5 + $0x68] sm:$0xff]
    %v48 = vld [vmem:[%s5 + $0x70] sm:$0xff]
    %v49 = vld [vmem:[%s5 + $0x78] sm:$0xff]
    %v50 = vld [vmem:[%s5 + $0x80] sm:$0xff]
    %v51 = vld [vmem:[%s5 + $0x88] sm:$0xff]
    %v52 = vld [vmem:[%s5 + $0x90] sm:$0xff]
    %v53 = vld [vmem:[%s5 + $0x98] sm:$0xff]
    %v54 = vld [vmem:[%s5 + $0xa0] sm:$0xff]
    %v55 = vld [vmem:[%s5 + $0xa8] sm:$0xff]
    %v56 = vld [vmem:[%s5 + $0xb0] sm:$0xff]
    %v57 = vld [vmem:[%s5 + $0xb8] sm:$0xff]
    %v58 = vld [vmem:[%s5 + $0xc0] sm:$0xff]
    %v59 = vld [vmem:[%s5 + $0xc8] sm:$0xff]
    %v60 = vld [vmem:[%s5 + $0xd0] sm:$0xff]
    %v61 = vld [vmem:[%s5 + $0xd8] sm:$0xff]
    %v62 = vld [vmem:[%s5 + $0xe0] sm:$0xff]
    %v63 = vld [vmem:[%s5 + $0xe8] sm:$0xff]
    %v64 = vld [vmem:[%s5 + $0xf0] sm:$0xff]
    %v65 = vld [vmem:[%s5 + $0xf8] sm:$0xff]
    %v66 = vld [vmem:[%s5 + $0x100] sm:$0xff]
    %v67 = vld [vmem:[%s5 + $0x108] sm:$0xff]
    %v68 = vld [vmem:[%s5 + $0x110] sm:$0xff]
    %v69 = vld [vmem:[%s5 + $0x118] sm:$0xff]
    %v70 = vld [vmem:[%s5 + $0x120] sm:$0xff]
    %v71 = vld [vmem:[%s5 + $0x128] sm:$0xff]
    %v72 = vld [vmem:[%s5 + $0x130] sm:$0xff]
    %v73 = vld [vmem:[%s5 + $0x138] sm:$0xff]
    %v74 = vld [vmem:[%s5 + $0x140] sm:$0xff]
    %v75 = vld [vmem:[%s5 + $0x148] sm:$0xff]
    %v76 = vld [vmem:[%s5 + $0x150] sm:$0xff]
    %v77 = vld [vmem:[%s5 + $0x158] sm:$0xff]
    %v78 = vld [vmem:[%s5 + $0x160] sm:$0xff]
    %v79 = vld [vmem:[%s5 + $0x168] sm:$0xff]
    %v80 = vld [vmem:[%s5 + $0x170] sm:$0xff]
    %v81 = vld [vmem:[%s5 + $0x178] sm:$0xff]
    %v82 = vld [vmem:[%s5 + $0x180] sm:$0xff]
    %v83 = vld [vmem:[%s5 + $0x188] sm:$0xff]
    %v84 = vld [vmem:[%s5 + $0x190] sm:$0xff]
    %v85 = vld [vmem:[%s5 + $0x198] sm:$0xff]
    %v86 = vld [vmem:[%s5 + $0x1a0] sm:$0xff]
    %v87 = vld [vmem:[%s5 + $0x1a8] sm:$0xff]
    %v88 = vld [vmem:[%s5 + $0x1b0] sm:$0xff]
    %v89 = vld [vmem:[%s5 + $0x1b8] sm:$0xff]
    %v90 = vld [vmem:[%s5 + $0x1c0] sm:$0xff]
    %v91 = vld [vmem:[%s5 + $0x1c8] sm:$0xff]
    %v92 = vld [vmem:[%s5 + $0x1d0] sm:$0xff]
    %v93 = vld [vmem:[%s5 + $0x1d8] sm:$0xff]
    %v94 = vld [vmem:[%s5 + $0x1e0] sm:$0x1]
    %v95 = vld [vmem:[%s5 + $0x1e8] sm:$0x1]
    %v96 = vld [vmem:[%s5 + $0x1f0] sm:$0x1]
    %v97 = vld [vmem:[%s5 + $0x1f8] sm:$0x1]
    %v98 = vld [vmem:[%s0] sm:$0x3]
    %v99 = vld [vmem:[%s2] sm:$0x3]
    %v100 = vlaneseq
    %v101 = vand.u32 %v100, 127
    %v102 = vadd.s32 %v101, 128
    %103 = vset.pattern.permute.xlu0 0
    %104 = vperm.xlu0 %103, %v98
    %v105 = vpop.permute.xlu0 %104
    %vm106 = vcmp.eq.s32.totalorder %v101, %v105
    %vm107 = vcmp.eq.s32.totalorder %v102, %v105
    %v108 = vadd.s32 %v99, 128
    %109 = vset.pattern.permute.xlu0 0
    %110 = vperm.xlu0 %109, %v108
    %v111 = vpop.permute.xlu0 %110
    %vm112 = vcmp.eq.s32.totalorder %v101, %v111
    %vm113 = vcmp.eq.s32.totalorder %v102, %v111
    %vm114 = vmor %vm106, %vm112
    %vm115 = vmor %vm107, %vm113
    %v116 = vsel %vm114, 1, 0
    %v117 = vsel %vm115, 1, 0
    %v118 = vcvt.s32.f32 %v116
    %v119 = vcvt.s32.f32 %v117
    %120 = vmatpush.msra.mxu0 %v49
    %121 = vmatpush.msra.mxu0 %v48
    %122 = vmatpush.msra.mxu0 %v47
    %123 = vmatpush.msra.mxu0 %v46
    %124 = vmatpush.msra.mxu0 %v45
    %125 = vmatpush.msra.mxu0 %v44
    %126 = vmatpush.msra.mxu0 %v43
    %127 = vmatpush.msra.mxu0 %v42
    %128 = vmatpush.msra.mxu0 %v41
    %129 = vmatpush.msra.mxu0 %v40
    %130 = vmatpush.msra.mxu0 %v39
    %131 = vmatpush.msra.mxu0 %v38
    %132 = vmatpush.msra.mxu0 %v37
    %133 = vmatpush.msra.mxu0 %v36
    %134 = vmatpush.msra.mxu0 %v35
    %135 = vmatpush.msra.mxu0 %v34
    %136 = vmatmul.f32.gmra.mxu0 %v118
    %v137 = vpop.f32.mrf.mxu0
    %v138 = vadd.f32 0.0, %v137
    %139 = vdwg.mxu0
    %140 = vmatpush.msra.mxu0 %v65
    %141 = vmatpush.msra.mxu0 %v64
    %142 = vmatpush.msra.mxu0 %v63
    %143 = vmatpush.msra.mxu0 %v62
    %144 = vmatpush.msra.mxu0 %v61
    %145 = vmatpush.msra.mxu0 %v60
    %146 = vmatpush.msra.mxu0 %v59
    %147 = vmatpush.msra.mxu0 %v58
    %148 = vmatpush.msra.mxu0 %v57
    %149 = vmatpush.msra.mxu0 %v56
    %150 = vmatpush.msra.mxu0 %v55
    %151 = vmatpush.msra.mxu0 %v54
    %152 = vmatpush.msra.mxu0 %v53
    %153 = vmatpush.msra.mxu0 %v52
    %154 = vmatpush.msra.mxu0 %v51
    %155 = vmatpush.msra.mxu0 %v50
    %156 = vmatmul.f32.gmra.mxu0 %v119
    %v157 = vpop.f32.mrf.mxu0
    %v158 = vadd.f32 %v138, %v157
    %159 = vdwg.mxu0
    %v160 = vld [vmem:[%s1] sm:$0x3]
    %v161 = vcvt.s32.f32 %v160
    %v162 = vld [vmem:[%s3] sm:$0x3]
    %v163 = vcvt.s32.f32 %v162
    %vm164 = vcmp.lt.s32.totalorder %v101, 32
    %166 = vset.pattern.permute.xlu0 0
    %167 = vperm.xlu0 %166, %v161
    %v168 = vpop.permute.xlu0 %167
    %171 = vset.pattern.permute.xlu0 0
    %172 = vperm.xlu0 %171, %v163
    %v173 = vpop.permute.xlu0 %172
    %v175 = vsel %vm164, %v168, %v173
    %v176 = vmul.f32 %v158, %v175
    %v177 = vtanh.pop %v176
    %v178 = vld [vmem:[%s4] sm:$0xff]
    %v179 = vld [vmem:[%s4 + $0x8] sm:$0xf]
    %v180 = vld [vmem:[%s6] sm:$0xff]
    %v181 = vld [vmem:[%s6 + $0x8] sm:$0xff]
    %v182 = vld [vmem:[%s6 + $0x10] sm:$0xff]
    %v183 = vld [vmem:[%s6 + $0x18] sm:$0xff]
    %v184 = vld [vmem:[%s6 + $0x20] sm:$0xff]
    %v185 = vld [vmem:[%s6 + $0x28] sm:$0xff]
    %v186 = vld [vmem:[%s6 + $0x30] sm:$0xff]
    %v187 = vld [vmem:[%s6 + $0x38] sm:$0xff]
    %v188 = vld [vmem:[%s6 + $0x40] sm:$0xff]
    %v189 = vld [vmem:[%s6 + $0x48] sm:$0xff]
    %v190 = vld [vmem:[%s6 + $0x50] sm:$0xff]
    %v191 = vld [vmem:[%s6 + $0x58] sm:$0xff]
    %v192 = vld [vmem:[%s6 + $0x60] sm:$0xff]
    %v193 = vld [vmem:[%s6 + $0x68] sm:$0xff]
    %v194 = vld [vmem:[%s6 + $0x70] sm:$0xff]
    %v195 = vld [vmem:[%s6 + $0x78] sm:$0xff]
    %v196 = vld [vmem:[%s6 + $0x80] sm:$0xff]
    %v197 = vld [vmem:[%s6 + $0x88] sm:$0xff]
    %v198 = vld [vmem:[%s6 + $0x90] sm:$0xff]
    %v199 = vld [vmem:[%s6 + $0x98] sm:$0xff]
    %v200 = vld [vmem:[%s6 + $0xa0] sm:$0xff]
    %v201 = vld [vmem:[%s6 + $0xa8] sm:$0xff]
    %v202 = vld [vmem:[%s6 + $0xb0] sm:$0xff]
    %v203 = vld [vmem:[%s6 + $0xb8] sm:$0xff]
    %v204 = vld [vmem:[%s6 + $0xc0] sm:$0xff]
    %v205 = vld [vmem:[%s6 + $0xc8] sm:$0xff]
    %v206 = vld [vmem:[%s6 + $0xd0] sm:$0xff]
    %v207 = vld [vmem:[%s6 + $0xd8] sm:$0xff]
    %v208 = vld [vmem:[%s6 + $0xe0] sm:$0xff]
    %v209 = vld [vmem:[%s6 + $0xe8] sm:$0xff]
    %v210 = vld [vmem:[%s6 + $0xf0] sm:$0xff]
    %v211 = vld [vmem:[%s6 + $0xf8] sm:$0xff]
    %v212 = vld [vmem:[%s6 + $0x100] sm:$0xff]
    %v213 = vld [vmem:[%s6 + $0x108] sm:$0xff]
    %v214 = vld [vmem:[%s6 + $0x110] sm:$0xff]
    %v215 = vld [vmem:[%s6 + $0x118] sm:$0xff]
    %v216 = vld [vmem:[%s6 + $0x120] sm:$0xff]
    %v217 = vld [vmem:[%s6 + $0x128] sm:$0xff]
    %v218 = vld [vmem:[%s6 + $0x130] sm:$0xff]
    %v219 = vld [vmem:[%s6 + $0x138] sm:$0xff]
    %v220 = vld [vmem:[%s6 + $0x140] sm:$0xff]
    %v221 = vld [vmem:[%s6 + $0x148] sm:$0xff]
    %v222 = vld [vmem:[%s6 + $0x150] sm:$0xff]
    %v223 = vld [vmem:[%s6 + $0x158] sm:$0xff]
    %v224 = vld [vmem:[%s6 + $0x160] sm:$0xff]
    %v225 = vld [vmem:[%s6 + $0x168] sm:$0xff]
    %v226 = vld [vmem:[%s6 + $0x170] sm:$0xff]
    %v227 = vld [vmem:[%s6 + $0x178] sm:$0xff]
    %v228 = vld [vmem:[%s6 + $0x180] sm:$0xff]
    %v229 = vld [vmem:[%s6 + $0x188] sm:$0xff]
    %v230 = vld [vmem:[%s6 + $0x190] sm:$0xff]
    %v231 = vld [vmem:[%s6 + $0x198] sm:$0xff]
    %v232 = vld [vmem:[%s6 + $0x1a0] sm:$0xff]
    %v233 = vld [vmem:[%s6 + $0x1a8] sm:$0xff]
    %v234 = vld [vmem:[%s6 + $0x1b0] sm:$0xff]
    %v235 = vld [vmem:[%s6 + $0x1b8] sm:$0xff]
    %v236 = vld [vmem:[%s6 + $0x1c0] sm:$0xff]
    %v237 = vld [vmem:[%s6 + $0x1c8] sm:$0xff]
    %v238 = vld [vmem:[%s6 + $0x1d0] sm:$0xff]
    %v239 = vld [vmem:[%s6 + $0x1d8] sm:$0xff]
    %v240 = vld [vmem:[%s6 + $0x1e0] sm:$0xff]
    %v241 = vld [vmem:[%s6 + $0x1e8] sm:$0xff]
    %v242 = vld [vmem:[%s6 + $0x1f0] sm:$0xff]
    %v243 = vld [vmem:[%s6 + $0x1f8] sm:$0xff]
    %v244 = vld [vmem:[%s6 + $0x200] sm:$0xff]
    %v245 = vld [vmem:[%s6 + $0x208] sm:$0xff]
    %v246 = vld [vmem:[%s6 + $0x210] sm:$0xff]
    %v247 = vld [vmem:[%s6 + $0x218] sm:$0xff]
    %v248 = vld [vmem:[%s6 + $0x220] sm:$0xff]
    %v249 = vld [vmem:[%s6 + $0x228] sm:$0xff]
    %v250 = vld [vmem:[%s6 + $0x230] sm:$0xff]
    %v251 = vld [vmem:[%s6 + $0x238] sm:$0xff]
    %v252 = vld [vmem:[%s6 + $0x240] sm:$0xff]
    %v253 = vld [vmem:[%s6 + $0x248] sm:$0xff]
    %v254 = vld [vmem:[%s6 + $0x250] sm:$0xff]
    %v255 = vld [vmem:[%s6 + $0x258] sm:$0xff]
    %v256 = vld [vmem:[%s6 + $0x260] sm:$0xff]
    %v257 = vld [vmem:[%s6 + $0x268] sm:$0xff]
    %v258 = vld [vmem:[%s6 + $0x270] sm:$0xff]
    %v259 = vld [vmem:[%s6 + $0x278] sm:$0xff]
    %v260 = vld [vmem:[%s6 + $0x280] sm:$0xff]
    %v261 = vld [vmem:[%s6 + $0x288] sm:$0xff]
    %v262 = vld [vmem:[%s6 + $0x290] sm:$0xff]
    %v263 = vld [vmem:[%s6 + $0x298] sm:$0xff]
    %v264 = vld [vmem:[%s6 + $0x2a0] sm:$0xff]
    %v265 = vld [vmem:[%s6 + $0x2a8] sm:$0xff]
    %v266 = vld [vmem:[%s6 + $0x2b0] sm:$0xff]
    %v267 = vld [vmem:[%s6 + $0x2b8] sm:$0xff]
    %v268 = vld [vmem:[%s6 + $0x2c0] sm:$0xff]
    %v269 = vld [vmem:[%s6 + $0x2c8] sm:$0xff]
    %v270 = vld [vmem:[%s6 + $0x2d0] sm:$0xff]
    %v271 = vld [vmem:[%s6 + $0x2d8] sm:$0xff]
    %v272 = vld [vmem:[%s6 + $0x2e0] sm:$0xff]
    %v273 = vld [vmem:[%s6 + $0x2e8] sm:$0xff]
    %v274 = vld [vmem:[%s6 + $0x2f0] sm:$0xff]
    %v275 = vld [vmem:[%s6 + $0x2f8] sm:$0xff]
    %v276 = vperm.slane %v96, 0
    %279 = vst [vmem:[#allocation1] ss:$4 sm:$0xff] %v178
    %s280 = scalar_lea.vmem [#allocation1], 32
    %281 = vst [vmem:[%s280] ss:$4 sm:$0xff] %v179
    %v282 = vld.sshfl [vmem:[#allocation1] sm:$0xff pattern:$0x73625140]
    %v283 = vld.sshfl [vmem:[#allocation1 + $0x8] sm:$0xff pattern:$0x73625140]
    %v284 = vld.sshfl [vmem:[#allocation1 + $0x10] sm:$0xff pattern:$0x73625140]
    %v285 = vld.sshfl [vmem:[#allocation1 + $0x18] sm:$0xff pattern:$0x73625140]
    %v286 = vld.sshfl [vmem:[#allocation1 + $0x20] sm:$0xff pattern:$0x73625140]
    %v287 = vld.sshfl [vmem:[#allocation1 + $0x28] sm:$0xff pattern:$0x73625140]
    %294 = vmatpush.msra.mxu0 %v195
    %295 = vmatpush.msra.mxu0 %v194
    %296 = vmatpush.msra.mxu0 %v193
    %297 = vmatpush.msra.mxu0 %v192
    %298 = vmatpush.msra.mxu0 %v191
    %299 = vmatpush.msra.mxu0 %v190
    %300 = vmatpush.msra.mxu0 %v189
    %301 = vmatpush.msra.mxu0 %v188
    %302 = vmatpush.msra.mxu0 %v187
    %303 = vmatpush.msra.mxu0 %v186
    %304 = vmatpush.msra.mxu0 %v185
    %305 = vmatpush.msra.mxu0 %v184
    %306 = vmatpush.msra.mxu0 %v183
    %307 = vmatpush.msra.mxu0 %v182
    %308 = vmatpush.msra.mxu0 %v181
    %309 = vmatpush.msra.mxu0 %v180
    %310 = vmatmul.f32.gmra.mxu0 %v282
    %v311 = vpop.f32.mrf.mxu0
    %v312 = vadd.f32 %v276, %v311
    %313 = vdwg.mxu0
    %314 = vmatpush.msra.mxu0 %v211
    %315 = vmatpush.msra.mxu0 %v210
    %316 = vmatpush.msra.mxu0 %v209
    %317 = vmatpush.msra.mxu0 %v208
    %318 = vmatpush.msra.mxu0 %v207
    %319 = vmatpush.msra.mxu0 %v206
    %320 = vmatpush.msra.mxu0 %v205
    %321 = vmatpush.msra.mxu0 %v204
    %322 = vmatpush.msra.mxu0 %v203
    %323 = vmatpush.msra.mxu0 %v202
    %324 = vmatpush.msra.mxu0 %v201
    %325 = vmatpush.msra.mxu0 %v200
    %326 = vmatpush.msra.mxu0 %v199
    %327 = vmatpush.msra.mxu0 %v198
    %328 = vmatpush.msra.mxu0 %v197
    %329 = vmatpush.msra.mxu0 %v196
    %330 = vmatmul.f32.gmra.mxu0 %v283
    %v331 = vpop.f32.mrf.mxu0
    %v332 = vadd.f32 %v312, %v331
    %333 = vdwg.mxu0
    %334 = vmatpush.msra.mxu0 %v227
    %335 = vmatpush.msra.mxu0 %v226
    %336 = vmatpush.msra.mxu0 %v225
    %337 = vmatpush.msra.mxu0 %v224
    %338 = vmatpush.msra.mxu0 %v223
    %339 = vmatpush.msra.mxu0 %v222
    %340 = vmatpush.msra.mxu0 %v221
    %341 = vmatpush.msra.mxu0 %v220
    %342 = vmatpush.msra.mxu0 %v219
    %343 = vmatpush.msra.mxu0 %v218
    %344 = vmatpush.msra.mxu0 %v217
    %345 = vmatpush.msra.mxu0 %v216
    %346 = vmatpush.msra.mxu0 %v215
    %347 = vmatpush.msra.mxu0 %v214
    %348 = vmatpush.msra.mxu0 %v213
    %349 = vmatpush.msra.mxu0 %v212
    %350 = vmatmul.f32.gmra.mxu0 %v284
    %v351 = vpop.f32.mrf.mxu0
    %v352 = vadd.f32 %v332, %v351
    %353 = vdwg.mxu0
    %354 = vmatpush.msra.mxu0 %v243
    %355 = vmatpush.msra.mxu0 %v242
    %356 = vmatpush.msra.mxu0 %v241
    %357 = vmatpush.msra.mxu0 %v240
    %358 = vmatpush.msra.mxu0 %v239
    %359 = vmatpush.msra.mxu0 %v238
    %360 = vmatpush.msra.mxu0 %v237
    %361 = vmatpush.msra.mxu0 %v236
    %362 = vmatpush.msra.mxu0 %v235
    %363 = vmatpush.msra.mxu0 %v234
    %364 = vmatpush.msra.mxu0 %v233
    %365 = vmatpush.msra.mxu0 %v232
    %366 = vmatpush.msra.mxu0 %v231
    %367 = vmatpush.msra.mxu0 %v230
    %368 = vmatpush.msra.mxu0 %v229
    %369 = vmatpush.msra.mxu0 %v228
    %370 = vmatmul.f32.gmra.mxu0 %v285
    %v371 = vpop.f32.mrf.mxu0
    %v372 = vadd.f32 %v352, %v371
    %373 = vdwg.mxu0
    %374 = vmatpush.msra.mxu0 %v259
    %375 = vmatpush.msra.mxu0 %v258
    %376 = vmatpush.msra.mxu0 %v257
    %377 = vmatpush.msra.mxu0 %v256
    %378 = vmatpush.msra.mxu0 %v255
    %379 = vmatpush.msra.mxu0 %v254
    %380 = vmatpush.msra.mxu0 %v253
    %381 = vmatpush.msra.mxu0 %v252
    %382 = vmatpush.msra.mxu0 %v251
    %383 = vmatpush.msra.mxu0 %v250
    %384 = vmatpush.msra.mxu0 %v249
    %385 = vmatpush.msra.mxu0 %v248
    %386 = vmatpush.msra.mxu0 %v247
    %387 = vmatpush.msra.mxu0 %v246
    %388 = vmatpush.msra.mxu0 %v245
    %389 = vmatpush.msra.mxu0 %v244
    %390 = vmatmul.f32.gmra.mxu0 %v286
    %v391 = vpop.f32.mrf.mxu0
    %v392 = vadd.f32 %v372, %v391
    %393 = vdwg.mxu0
    %394 = vmatpush.msra.mxu0 %v275
    %395 = vmatpush.msra.mxu0 %v274
    %396 = vmatpush.msra.mxu0 %v273
    %397 = vmatpush.msra.mxu0 %v272
    %398 = vmatpush.msra.mxu0 %v271
    %399 = vmatpush.msra.mxu0 %v270
    %400 = vmatpush.msra.mxu0 %v269
    %401 = vmatpush.msra.mxu0 %v268
    %402 = vmatpush.msra.mxu0 %v267
    %403 = vmatpush.msra.mxu0 %v266
    %404 = vmatpush.msra.mxu0 %v265
    %405 = vmatpush.msra.mxu0 %v264
    %406 = vmatpush.msra.mxu0 %v263
    %407 = vmatpush.msra.mxu0 %v262
    %408 = vmatpush.msra.mxu0 %v261
    %409 = vmatpush.msra.mxu0 %v260
    %410 = vmatmul.f32.gmra.mxu0 %v287
    %v411 = vpop.f32.mrf.mxu0
    %v412 = vadd.f32 %v392, %v411
    %413 = vdwg.mxu0
    %v414 = vtanh.pop %v412
    %vm415 = vcmask 261120
    %v417 = vsel %vm415, %v414, 0
    %419 = vmatpush.msra.mxu0 0.0
    %420 = vmatpush.msra.mxu0 0.0
    %421 = vmatpush.msra.mxu0 0.0
    %422 = vmatpush.msra.mxu0 0.0
    %423 = vmatpush.msra.mxu0 0.0
    %424 = vmatpush.msra.mxu0 0.0
    %425 = vmatpush.msra.mxu0 0.0
    %426 = vmatpush.msra.mxu0 0.0
    %427 = vmatpush.msra.mxu0 0.0
    %428 = vmatpush.msra.mxu0 0.0
    %429 = vmatpush.msra.mxu0 0.0
    %430 = vmatpush.msra.mxu0 0.0
    %431 = vmatpush.msra.mxu0 %v77
    %432 = vmatpush.msra.mxu0 %v76
    %433 = vmatpush.msra.mxu0 %v75
    %434 = vmatpush.msra.mxu0 %v74
    %435 = vmatmul.f32.gmra.mxu0 %v417
    %v436 = vpop.f32.mrf.mxu0
    %v437 = vadd.f32 0.0, %v436
    %438 = vdwg.mxu0
    %vm439 = vcmask 523264
    %v441 = vsel %vm439, %v177, 0
    %443 = vmatpush.msra.mxu0 0.0
    %444 = vmatpush.msra.mxu0 0.0
    %445 = vmatpush.msra.mxu0 0.0
    %446 = vmatpush.msra.mxu0 0.0
    %447 = vmatpush.msra.mxu0 0.0
    %448 = vmatpush.msra.mxu0 0.0
    %449 = vmatpush.msra.mxu0 0.0
    %450 = vmatpush.msra.mxu0 0.0
    %451 = vmatpush.msra.mxu0 %v73
    %452 = vmatpush.msra.mxu0 %v72
    %453 = vmatpush.msra.mxu0 %v71
    %454 = vmatpush.msra.mxu0 %v70
    %455 = vmatpush.msra.mxu0 %v69
    %456 = vmatpush.msra.mxu0 %v68
    %457 = vmatpush.msra.mxu0 %v67
    %458 = vmatpush.msra.mxu0 %v66
    %459 = vmatmul.f32.gmra.mxu0 %v441
    %v460 = vpop.f32.mrf.mxu0
    %v461 = vadd.f32 %v437, %v460
    %462 = vdwg.mxu0
    %v463 = vperm.slane %v94, 0
    %v464 = vadd.f32 %v461, %v463
    %v465 = vmax.f32 %v464, 0.0
    %v466 = vtanh.pop %v464
    %468 = vrot.lane.b32.xlu0 %v466, 64
    %v469 = vpop.permute.xlu0 %468
    %v470 = vsel %vm439, %v469, 0
    %472 = vmatpush.msra.mxu0 0.0
    %473 = vmatpush.msra.mxu0 0.0
    %474 = vmatpush.msra.mxu0 0.0
    %475 = vmatpush.msra.mxu0 0.0
    %476 = vmatpush.msra.mxu0 0.0
    %477 = vmatpush.msra.mxu0 0.0
    %478 = vmatpush.msra.mxu0 0.0
    %479 = vmatpush.msra.mxu0 0.0
    %480 = vmatpush.msra.mxu0 %v85
    %481 = vmatpush.msra.mxu0 %v84
    %482 = vmatpush.msra.mxu0 %v83
    %483 = vmatpush.msra.mxu0 %v82
    %484 = vmatpush.msra.mxu0 %v81
    %485 = vmatpush.msra.mxu0 %v80
    %486 = vmatpush.msra.mxu0 %v79
    %487 = vmatpush.msra.mxu0 %v78
    %488 = vmatmul.f32.gmra.mxu0 %v470
    %v489 = vpop.f32.mrf.mxu0
    %v490 = vadd.f32 0.0, %v489
    %491 = vdwg.mxu0
    %v492 = vmul.f32 %v490, %v490
    %vm493 = vcmask 123904
    %v494 = vsel %vm493, %v492, 0.0
    %495 = vadd.xlane.f32.xlu0 %v494
    %v496 = vpop.xlane.xlu0 %495
    %v497 = vmax.f32 %v496, 1e-24
    %v498 = vrsqrt.pop %v497
    %v499 = vmul.f32 %v498, %v497
    %v500 = vmul.f32 %v499, %v498
    %v501 = vmul.f32 0.5, %v500
    %v502 = vsub.f32 1.5, %v501
    %v503 = vmul.f32 %v498, %v502
    %vm504 = vweird.f32 %v497
    %vm505 = vweird.f32 %v498
    %vm506 = vmor %vm504, %vm505
    %v507 = vsel %vm506, %v498, %v503
    %v508 = vmul.f32 %v490, %v507
    %510 = vrot.lane.b32.xlu0 %v492, 112
    %v511 = vpop.permute.xlu0 %510
    %v513 = vsel %vm493, %v511, 0.0
    %514 = vadd.xlane.f32.xlu0 %v513
    %v515 = vpop.xlane.xlu0 %514
    %v516 = vmax.f32 %v515, 1e-24
    %v517 = vrsqrt.pop %v516
    %v518 = vmul.f32 %v517, %v516
    %v519 = vmul.f32 %v518, %v517
    %v520 = vmul.f32 0.5, %v519
    %v521 = vsub.f32 1.5, %v520
    %v522 = vmul.f32 %v517, %v521
    %vm523 = vweird.f32 %v516
    %vm524 = vweird.f32 %v517
    %vm525 = vmor %vm523, %vm524
    %v526 = vsel %vm525, %v517, %v522
    %v527 = vmul.f32 %v490, %v526
    %529 = vrot.lane.b32.xlu0 %v527, 112
    %v530 = vpop.permute.xlu0 %529
    %vm531 = vcmask 130048
    %v533 = vsel %vm531, %v508, 0
    %v535 = vsel %vm531, %v530, 0
    %537 = vmatpush.xpose.msra.mxu0 0.0
    %538 = vmatpush.xpose.msra.mxu0 0.0
    %539 = vmatpush.xpose.msra.mxu0 0.0
    %540 = vmatpush.xpose.msra.mxu0 0.0
    %541 = vmatpush.xpose.msra.mxu0 0.0
    %542 = vmatpush.xpose.msra.mxu0 0.0
    %543 = vmatpush.xpose.msra.mxu0 0.0
    %544 = vmatpush.xpose.msra.mxu0 0.0
    %545 = vmatpush.xpose.msra.mxu0 0.0
    %546 = vmatpush.xpose.msra.mxu0 0.0
    %547 = vmatpush.xpose.msra.mxu0 0.0
    %548 = vmatpush.xpose.msra.mxu0 0.0
    %549 = vmatpush.xpose.msra.mxu0 0.0
    %550 = vmatpush.xpose.msra.mxu0 0.0
    %551 = vmatpush.xpose.msra.mxu0 0.0
    %552 = vmatpush.xpose.msra.mxu0 %v535
    %553 = vmatmul.f32.gmra.mxu0 %v533
    %v554 = vpop.f32.mrf.mxu0
    %v555 = vadd.f32 0.0, %v554
    %556 = vdwg.mxu0
    %s558 = vtos %v97
    %v559 = vstv %s558
    %v561 = vmul.f32 %v559, %v555
    %vm562 = vcmask 9216
    %563 = vst.msk [vmem:[#allocation4] sm:$0x3] %vm562, %v561
    %v564 = vperm.slane %v95, 0
    %v566 = vsel %vm439, %v465, 0
    %568 = vmatpush.msra.mxu0 0.0
    %569 = vmatpush.msra.mxu0 0.0
    %570 = vmatpush.msra.mxu0 0.0
    %571 = vmatpush.msra.mxu0 0.0
    %572 = vmatpush.msra.mxu0 0.0
    %573 = vmatpush.msra.mxu0 0.0
    %574 = vmatpush.msra.mxu0 0.0
    %575 = vmatpush.msra.mxu0 0.0
    %576 = vmatpush.msra.mxu0 %v93
    %577 = vmatpush.msra.mxu0 %v92
    %578 = vmatpush.msra.mxu0 %v91
    %579 = vmatpush.msra.mxu0 %v90
    %580 = vmatpush.msra.mxu0 %v89
    %581 = vmatpush.msra.mxu0 %v88
    %582 = vmatpush.msra.mxu0 %v87
    %583 = vmatpush.msra.mxu0 %v86
    %584 = vmatmul.f32.gmra.mxu0 %v566
    %v585 = vpop.f32.mrf.mxu0
    %v586 = vadd.f32 %v564, %v585
    %587 = vdwg.mxu0
    %vm588 = vcmask 17408
    %589 = vst.msk [vmem:[#allocation2] sm:$0x3] %vm588, %v586
    %591 = vrot.lane.b32.xlu0 %v586, 125
    %v592 = vpop.permute.xlu0 %591
    %594 = vst.msk [vmem:[#allocation7] sm:$0x3] %vm562, %v592
    %595 = vrot.lane.b32.xlu0 %v586, 123
    %v596 = vpop.permute.xlu0 %595
    %598 = vst.msk [vmem:[#allocation6] sm:$0x3] %vm562, %v596
    %vm599 = vcmask 254976
    %600 = vst.msk [vmem:[#allocation9] sm:$0x3] %vm599, %v465
    // Predicated region
    $region30: #{mm_model_forward.1} parent=1 // pred_check
      _
    $region31: #{mm_model_forward.1} parent=1 // pred_check_branch
      %602 = sbr.rel (0) target = $region33
    $region32: #{mm_model_forward.1} parent=1 // pred_region
      %604 = vsyncadd [#allocation3], 0
      %s606 = sshll.u32 [#allocation2], 4
      %s607 = int_to_ptr.vmem [resolvable:$true] %s606
      %s608 = sshll.u32 %s7, 4
      %s609 = int_to_ptr.hbm [resolvable:$true] %s608
      %611 = dma.vmem_to_hbm [thread:$0]  %s607, 32, %s609, [#allocation3]
    $region33: #{mm_model_forward.1} parent=1 // pred_fallthru
      _
    // Predicated region
    $region34: #{mm_model_forward.1} parent=1 // pred_check
      _
    $region35: #{mm_model_forward.1} parent=1 // pred_check_branch
      %613 = sbr.rel (0) target = $region37
    $region36: #{mm_model_forward.1} parent=1 // pred_region
      %615 = vsyncadd [#allocation5], 0
      %s617 = sshll.u32 [#allocation4], 4
      %s618 = int_to_ptr.vmem [resolvable:$true] %s617
      %s619 = sshll.u32 %s8, 4
      %s620 = int_to_ptr.hbm [resolvable:$true] %s619
      %622 = dma.vmem_to_hbm [thread:$0]  %s618, 32, %s620, [#allocation5]
    $region37: #{mm_model_forward.1} parent=1 // pred_fallthru
      _
    // Predicated region
    $region38: #{mm_model_forward.1} parent=1 // pred_check
      _
    $region39: #{mm_model_forward.1} parent=1 // pred_check_branch
      %624 = sbr.rel (0) target = $region41
    $region40: #{mm_model_forward.1} parent=1 // pred_region
      %626 = vsyncadd [#allocation5], 0
      %s628 = sshll.u32 [#allocation6], 4
      %s629 = int_to_ptr.vmem [resolvable:$true] %s628
      %s630 = sshll.u32 %s9, 4
      %s631 = int_to_ptr.hbm [resolvable:$true] %s630
      %633 = dma.vmem_to_hbm [thread:$0]  %s629, 32, %s631, [#allocation5]
    $region41: #{mm_model_forward.1} parent=1 // pred_fallthru
      _
    // Predicated region
    $region42: #{mm_model_forward.1} parent=1 // pred_check
      _
    $region43: #{mm_model_forward.1} parent=1 // pred_check_branch
      %635 = sbr.rel (0) target = $region45
    $region44: #{mm_model_forward.1} parent=1 // pred_region
      %637 = vsyncadd [#allocation8], 0
      %s639 = sshll.u32 [#allocation7], 4
      %s640 = int_to_ptr.vmem [resolvable:$true] %s639
      %s641 = sshll.u32 %s10, 4
      %s642 = int_to_ptr.hbm [resolvable:$true] %s641
      %644 = dma.vmem_to_hbm [thread:$0]  %s640, 32, %s642, [#allocation8]
    $region45: #{mm_model_forward.1} parent=1 // pred_fallthru
      _
    // Predicated region
    $region46: #{mm_model_forward.1} parent=1 // pred_check
      _
    $region47: #{mm_model_forward.1} parent=1 // pred_check_branch
      %646 = sbr.rel (0) target = $region49
    $region48: #{mm_model_forward.1} parent=1 // pred_region
      %648 = vsyncadd [#allocation8], 0
      %s650 = sshll.u32 [#allocation9], 4
      %s651 = int_to_ptr.vmem [resolvable:$true] %s650
      %s652 = sshll.u32 %s11, 4
      %s653 = int_to_ptr.hbm [resolvable:$true] %s652
      %655 = dma.vmem_to_hbm [thread:$0]  %s651, 32, %s653, [#allocation8]
    $region49: #{mm_model_forward.1} parent=1 // pred_fallthru
      _
    // Predicated region
    $region50: #{mm_model_forward.1} parent=1 // pred_check
      _
    $region51: #{mm_model_forward.1} parent=1 // pred_check_branch
      %657 = sbr.rel (0) target = $region53
    $region52: #{mm_model_forward.1} parent=1 // pred_region
      %659 = dma.done [#allocation3], 32
    $region53: #{mm_model_forward.1} parent=1 // pred_fallthru
      _
    // Predicated region
    $region54: #{mm_model_forward.1} parent=1 // pred_check
      _
    $region55: #{mm_model_forward.1} parent=1 // pred_check_branch
      %661 = sbr.rel (0) target = $region57
    $region56: #{mm_model_forward.1} parent=1 // pred_region
      %663 = dma.done [#allocation5], 32
    $region57: #{mm_model_forward.1} parent=1 // pred_fallthru
      _
    // Predicated region
    $region58: #{mm_model_forward.1} parent=1 // pred_check
      _
    $region59: #{mm_model_forward.1} parent=1 // pred_check_branch
      %665 = sbr.rel (0) target = $region61
    $region60: #{mm_model_forward.1} parent=1 // pred_region
      %667 = dma.done [#allocation5], 32
    $region61: #{mm_model_forward.1} parent=1 // pred_fallthru
      _
    // Predicated region
    $region62: #{mm_model_forward.1} parent=1 // pred_check
      _
    $region63: #{mm_model_forward.1} parent=1 // pred_check_branch
      %669 = sbr.rel (0) target = $region65
    $region64: #{mm_model_forward.1} parent=1 // pred_region
      %671 = dma.done [#allocation8], 32
    $region65: #{mm_model_forward.1} parent=1 // pred_fallthru
      _
    // Predicated region
    $region66: #{mm_model_forward.1} parent=1 // pred_check
      _
    $region67: #{mm_model_forward.1} parent=1 // pred_check_branch
      %673 = sbr.rel (0) target = $region69
    $region68: #{mm_model_forward.1} parent=1 // pred_region
      %675 = dma.done [#allocation8], 32
    $region69: #{mm_model_forward.1} parent=1 // pred_fallthru
      _
    %676 = vsyncpa [#allocation3], 1
    %677 = vsyncpa [#allocation5], 1
    %678 = vsyncpa [#allocation8], 1

</llo_original>
